<compile_context>
chip_gen: v7x
topology: tpu7x:2x2x1
jax: 0.10.0
libtpu: 0.0.40
codegen_flags: <defaults>
</compile_context>

<pallas_src>
import math
import functools

import jax
import jax.numpy as jnp
from jax import lax
from jax.experimental import pallas as pl
from jax.experimental.pallas import tpu as pltpu

LN_EPS = 1e-12


def _round_up(x, m):
    return (x + m - 1) // m * m


def _hw_config():
    """Returns (vmem_budget_bytes, vmem_limit_bytes, min_row_tiles)."""
    kind = ""
    try:
        kind = jax.devices()[0].device_kind.lower()
    except Exception:
        pass
    if "v7" in kind or "tpu7" in kind:
        # v7x: 64 MiB VMEM per TensorCore, 2 TCs -> want >= 2 row tiles so the
        # second core isn't idle.
        return 40 << 20, 48 << 20, 2
    if "v6" in kind or "v5" in kind:
        # v5e/v5p/v6e: 128 MiB VMEM, single TensorCore per chip.
        return 96 << 20, 100 << 20, 1
    # Unknown generation: conservative budget that fits any modern TC.
    return 40 << 20, 48 << 20, 2


def _vmem_need_bytes(row_tile, vocab_tile, H, x_isz, w_isz, out_isz):
    """Conservative estimate of the (double-buffered) VMEM working set."""
    need = 0
    need += 2 * row_tile * H * x_isz            # x row tile
    need += 2 * H * H * w_isz                   # transform weight (grid-invariant)
    need += 2 * 3 * H * 4                       # transform bias, LN gamma/beta
    need += 2 * H * vocab_tile * w_isz          # decoder weight tile
    need += 2 * vocab_tile * 4                  # decoder bias tile
    need += 2 * row_tile * vocab_tile * out_isz # output tile
    need += row_tile * H * w_isz                # h_scratch (single buffer, wd dtype)
    return need


def _pick_tiles(N, H, V, x_isz, w_isz, out_isz, vmem_budget, min_row_tiles):
    v_ceil = max(128, _round_up(V, 128))
    # row_tile is the lever that cuts w_d HBM re-streaming -> maximize it
    # first, assuming a reasonably wide vocab tile.
    vt_floor = min(512, v_ceil)
    row_tile = 8
    for rt in (1024, 512, 256, 128, 64, 32, 16, 8):
        if rt > 8 and N < min_row_tiles * rt:
            continue
        if _vmem_need_bytes(rt, vt_floor, H, x_isz, w_isz, out_isz) <= vmem_budget:
            row_tile = rt
            break
    # Then widen the vocab tile as far as the remaining budget allows (cuts
    # grid-step overhead and keeps output stores lane-dense).
    vocab_tile = 128
    for vt in (4096, 2048, 1024, 512, 256, 128):
        if vt > v_ceil:
            continue
        if _vmem_need_bytes(row_tile, vt, H, x_isz, w_isz, out_isz) <= vmem_budget:
            vocab_tile = vt
            break
    return row_tile, vocab_tile


def _mlm_kernel(x_ref, wt_ref, bt_ref, g_ref, beta_ref, wd_ref, bd_ref,
                o_ref, h_scratch):
    # Grid = (row_tiles, vocab_tiles); vocab is the inner ("arbitrary") axis,
    # so the transform runs once per row tile (vocab index 0) and is cached in
    # VMEM -- already in the decoder-weight dtype (cast hoisted out of the
    # inner vocab loop).
    @pl.when(pl.program_id(1) == 0)
    def _():
        x = x_ref[...].astype(wt_ref.dtype)
        h = jnp.dot(x, wt_ref[...], preferred_element_type=jnp.float32)
        h = h + bt_ref[...]
        # exact (erf) GELU, matching BERT's default activation
        h = 0.5 * h * (1.0 + lax.erf(h * (1.0 / math.sqrt(2.0))))
        # LayerNorm over the hidden axis (biased variance, eps=1e-12), f32 math
        mean = jnp.mean(h, axis=-1, keepdims=True)
        var = jnp.mean((h - mean) ** 2, axis=-1, keepdims=True)
        h = (h - mean) * lax.rsqrt(var + LN_EPS)
        h = h * g_ref[...] + beta_ref[...]
        h_scratch[...] = h.astype(h_scratch.dtype)

    # decoder: (row_tile, H) @ (H, vocab_tile) on the MXU, f32 accumulation.
    logits = jnp.dot(h_scratch[...], wd_ref[...],
                     preferred_element_type=jnp.float32)
    logits = logits + bd_ref[...]
    o_ref[...] = logits.astype(o_ref.dtype)


@functools.partial(jax.jit, static_argnames=("logits_dtype",))
def mlm_head(sequence_output, w_t, b_t, gamma, beta, w_d, b_d, *,
             logits_dtype=None):
    """BERT MLM head. Weights: w_t [H,H], w_d [H,V] (transposed torch layout).

    `logits_dtype` lets the caller request bf16 logits (halves the logits
    writeback) when the downstream softmax/CE tolerates it.
    """
    B, S, H = sequence_output.shape
    V = w_d.shape[1]
    N = B * S

    out_dtype = (jnp.dtype(logits_dtype) if logits_dtype is not None
                 else sequence_output.dtype)
    x_isz = sequence_output.dtype.itemsize
    w_isz = w_d.dtype.itemsize
    out_isz = out_dtype.itemsize

    vmem_budget, vmem_limit, min_row_tiles = _hw_config()
    row_tile, vocab_tile = _pick_tiles(N, H, V, x_isz, w_isz, out_isz,
                                       vmem_budget, min_row_tiles)

    grid_m = pl.cdiv(N, row_tile)
    grid_v = pl.cdiv(V, vocab_tile)

    x2d = sequence_output.reshape(N, H)
    b_t2 = b_t.reshape(1, H).astype(jnp.float32)
    g2 = gamma.reshape(1, H).astype(jnp.float32)
    beta2 = beta.reshape(1, H).astype(jnp.float32)
    b_d2 = b_d.reshape(1, V).astype(jnp.float32)

    # Actual HBM traffic: x/w_t streamed once, w_d/b_d re-streamed once per
    # row tile, logits written once.
    cost = pl.CostEstimate(
        flops=2 * N * H * H + 2 * N * H * V,
        transcendentals=N * H,
        bytes_accessed=(N * H * x_isz + H * H * w_isz + 3 * H * 4
                        + grid_m * (H * V * w_isz + V * 4)
                        + N * V * out_isz))

    out = pl.pallas_call(
        _mlm_kernel,
        out_shape=jax.ShapeDtypeStruct((N, V), out_dtype),
        grid_spec=pltpu.PrefetchScalarGridSpec(
            num_scalar_prefetch=0,
            grid=(grid_m, grid_v),
            in_specs=[
                pl.BlockSpec((row_tile, H), lambda i, j: (i, 0)),     # x rows
                pl.BlockSpec((H, H), lambda i, j: (0, 0)),            # transform W
                pl.BlockSpec((1, H), lambda i, j: (0, 0)),            # transform b
                pl.BlockSpec((1, H), lambda i, j: (0, 0)),            # LN gamma
                pl.BlockSpec((1, H), lambda i, j: (0, 0)),            # LN beta
                pl.BlockSpec((H, vocab_tile), lambda i, j: (0, j)),   # decoder W
                pl.BlockSpec((1, vocab_tile), lambda i, j: (0, j)),   # decoder b
            ],
            out_specs=pl.BlockSpec((row_tile, vocab_tile), lambda i, j: (i, j)),
            # Transform output cached in the decoder-weight dtype.
            scratch_shapes=[pltpu.VMEM((row_tile, H), w_d.dtype)],
        ),
        compiler_params=pltpu.CompilerParams(
            dimension_semantics=("parallel", "arbitrary"),
            vmem_limit_bytes=vmem_limit),
        cost_estimate=cost,
    )(x2d, w_t, b_t2, g2, beta2, w_d, b_d2)

    return out.reshape(B, S, V)


def _reference(x, w_t, b_t, gamma, beta, w_d, b_d):
    h = jnp.dot(x, w_t) + b_t
    h = 0.5 * h * (1.0 + lax.erf(h / jnp.sqrt(2.0)))
    mean = jnp.mean(h, axis=-1, keepdims=True)
    var = jnp.mean((h - mean) ** 2, axis=-1, keepdims=True)
    h = (h - mean) / jnp.sqrt(var + LN_EPS) * gamma + beta
    return jnp.dot(h, w_d) + b_d


def _make_params(key, H, V):
    ks = jax.random.split(key, 4)
    w_t = jax.random.normal(ks[0], (H, H), jnp.float32) * 0.02
    b_t = jax.random.normal(ks[1], (H,), jnp.float32) * 0.02
    gamma = jnp.ones((H,), jnp.float32)
    beta = jnp.zeros((H,), jnp.float32)
    w_d = jax.random.normal(ks[2], (H, V), jnp.float32) * 0.02
    b_d = jax.random.normal(ks[3], (V,), jnp.float32) * 0.02
    return w_t, b_t, gamma, beta, w_d, b_d


if __name__ == "__main__":
    # Small synthetic shapes consistent with the module: hidden_size=32.
    # TODO(synk): pretrained 'bert-base-uncased' weights are replaced by
    # deterministic synthetic parameters (no checkpoint I/O in-script).
    key = jax.random.PRNGKey(0)
    k_x, k_x2, k_p, k_p2 = jax.random.split(key, 4)

    # 1) Aligned shapes, f32 weights -- tight check vs pure-JAX reference.
    B, S, H, V = 2, 8, 32, 256
    seq = jax.random.normal(k_x, (B, S, H), jnp.float32)
    w_t, b_t, gamma, beta, w_d, b_d = _make_params(k_p, H, V)

    y = mlm_head(seq, w_t, b_t, gamma, beta, w_d, b_d)
    y = jax.block_until_ready(y)
    y_ref = _reference(seq, w_t, b_t, gamma, beta, w_d, b_d)
    assert y.shape == (B, S, V)
    assert jnp.allclose(y, y_ref, atol=1e-4, rtol=1e-4)

    # 2) Non-tile-aligned shapes (exercise the cdiv grid / masked boundary
    #    blocks that replaced the old pad+slice path).
    B2, S2, H2, V2 = 2, 7, 32, 300
    seq2 = jax.random.normal(k_x2, (B2, S2, H2), jnp.float32)
    p2 = _make_params(k_p2, H2, V2)
    y2 = jax.block_until_ready(mlm_head(seq2, *p2))
    y2_ref = _reference(seq2, *p2)
    assert y2.shape == (B2, S2, V2)
    assert jnp.allclose(y2, y2_ref, atol=1e-4, rtol=1e-4)

    # 3) bf16-weight path with bf16 logits (production config): f32 MXU
    #    accumulation, f32 LayerNorm math -- loose tolerance vs f32 reference.
    y_bf16 = mlm_head(seq,
                      w_t.astype(jnp.bfloat16), b_t, gamma, beta,
                      w_d.astype(jnp.bfloat16), b_d,
                      logits_dtype=jnp.bfloat16)
    y_bf16 = jax.block_until_ready(y_bf16)
    assert y_bf16.shape == (B, S, V)
    assert y_bf16.dtype == jnp.bfloat16
    assert jnp.allclose(y_bf16.astype(jnp.float32), y_ref, atol=2e-2, rtol=2e-2)

    print("KERNEL_OK")
</pallas_src>

<mosaic_0001>
module attributes {stable_mosaic.version = 11 : i64} {
  func.func @_mlm_kernel(%arg0: i32, %arg1: i32, %arg2: memref<8x32xf32, #tpu.memory_space<vmem>>, %arg3: memref<32x32xf32, #tpu.memory_space<vmem>>, %arg4: memref<1x32xf32, #tpu.memory_space<vmem>>, %arg5: memref<1x32xf32, #tpu.memory_space<vmem>>, %arg6: memref<1x32xf32, #tpu.memory_space<vmem>>, %arg7: memref<32x256xf32, #tpu.memory_space<vmem>>, %arg8: memref<1x256xf32, #tpu.memory_space<vmem>>, %arg9: memref<8x256xf32, #tpu.memory_space<vmem>>, %arg10: memref<8x32xf32, #tpu.memory_space<vmem>>) attributes {dimension_semantics = [#tpu.dimension_semantics<parallel>, #tpu.dimension_semantics<arbitrary>], iteration_bounds = array<i64: 2, 1>, scalar_prefetch = 0 : i64, scratch_operands = 1 : i64, tpu.core_type = #tpu.core_type<tc>, window_params = [{transform_indices = @transform_0, window_bounds = array<i64: 8, 32>}, {pipeline_mode = #tpu.pipeline_mode<synchronous>, transform_indices = @transform_1, window_bounds = array<i64: 32, 32>}, {pipeline_mode = #tpu.pipeline_mode<synchronous>, transform_indices = @transform_2, window_bounds = array<i64: 1, 32>}, {pipeline_mode = #tpu.pipeline_mode<synchronous>, transform_indices = @transform_3, window_bounds = array<i64: 1, 32>}, {pipeline_mode = #tpu.pipeline_mode<synchronous>, transform_indices = @transform_4, window_bounds = array<i64: 1, 32>}, {transform_indices = @transform_5, window_bounds = array<i64: 32, 256>}, {transform_indices = @transform_6, window_bounds = array<i64: 1, 256>}, {transform_indices = @transform_7, window_bounds = array<i64: 8, 256>}]} {
    %c0_i32 = arith.constant 0 : i32
    %0 = arith.cmpi eq, %arg1, %c0_i32 : i32
    %1 = arith.extui %0 : i1 to i32
    %c0_i32_0 = arith.constant 0 : i32
    %2 = arith.cmpi ne, %1, %c0_i32_0 : i32
    scf.if %2 {
      %c0_8 = arith.constant 0 : index
      %c0_9 = arith.constant 0 : index
      %10 = vector.load %arg2[%c0_8, %c0_9] : memref<8x32xf32, #tpu.memory_space<vmem>>, vector<8x32xf32>
      %c0_10 = arith.constant 0 : index
      %c0_11 = arith.constant 0 : index
      %11 = vector.load %arg3[%c0_10, %c0_11] : memref<32x32xf32, #tpu.memory_space<vmem>>, vector<32x32xf32>
      %cst_12 = arith.constant dense<0.000000e+00> : vector<8x32xf32>
      %12 = tpu.matmul %10, %11, %cst_12 {dimension_numbers = #tpu.dot_dimension_numbers<[1], [0], [0], [1], [0, 0, 1, 1], [], []>} : vector<8x32xf32>, vector<32x32xf32>, vector<8x32xf32> -> vector<8x32xf32>
      %c0_13 = arith.constant 0 : index
      %c0_14 = arith.constant 0 : index
      %13 = vector.load %arg4[%c0_13, %c0_14] : memref<1x32xf32, #tpu.memory_space<vmem>>, vector<1x32xf32>
      %14 = vector.broadcast %13 : vector<1x32xf32> to vector<8x32xf32>
      %15 = arith.addf %12, %14 : vector<8x32xf32>
      %cst_15 = arith.constant 5.000000e-01 : f32
      %16 = vector.broadcast %cst_15 : f32 to vector<8x32xf32>
      %17 = arith.mulf %16, %15 : vector<8x32xf32>
      %cst_16 = arith.constant 0.707106769 : f32
      %18 = vector.broadcast %cst_16 : f32 to vector<8x32xf32>
      %19 = arith.mulf %15, %18 : vector<8x32xf32>
      %20 = math.erf %19 : vector<8x32xf32>
      %cst_17 = arith.constant 1.000000e+00 : f32
      %21 = vector.broadcast %cst_17 : f32 to vector<8x32xf32>
      %22 = arith.addf %21, %20 : vector<8x32xf32>
      %23 = arith.mulf %17, %22 : vector<8x32xf32>
      %cst_18 = arith.constant dense<0.000000e+00> : vector<8xf32>
      %24 = vector.multi_reduction <add>, %23, %cst_18 [1] : vector<8x32xf32> to vector<8xf32>
      %25 = vector.shape_cast %24 : vector<8xf32> to vector<8x1xf32>
      %cst_19 = arith.constant 3.200000e+01 : f32
      %26 = vector.broadcast %cst_19 : f32 to vector<8x1xf32>
      %27 = arith.divf %25, %26 : vector<8x1xf32>
      %28 = vector.broadcast %27 : vector<8x1xf32> to vector<8x32xf32>
      %29 = arith.subf %23, %28 : vector<8x32xf32>
      %30 = arith.mulf %29, %29 : vector<8x32xf32>
      %cst_20 = arith.constant dense<0.000000e+00> : vector<8xf32>
      %31 = vector.multi_reduction <add>, %30, %cst_20 [1] : vector<8x32xf32> to vector<8xf32>
      %32 = vector.shape_cast %31 : vector<8xf32> to vector<8x1xf32>
      %cst_21 = arith.constant 3.200000e+01 : f32
      %33 = vector.broadcast %cst_21 : f32 to vector<8x1xf32>
      %34 = arith.divf %32, %33 : vector<8x1xf32>
      %35 = vector.broadcast %27 : vector<8x1xf32> to vector<8x32xf32>
      %36 = arith.subf %23, %35 : vector<8x32xf32>
      %cst_22 = arith.constant 9.99999996E-13 : f32
      %37 = vector.broadcast %cst_22 : f32 to vector<8x1xf32>
      %38 = arith.addf %34, %37 : vector<8x1xf32>
      %39 = math.rsqrt %38 : vector<8x1xf32>
      %40 = vector.broadcast %39 : vector<8x1xf32> to vector<8x32xf32>
      %41 = arith.mulf %36, %40 : vector<8x32xf32>
      %c0_23 = arith.constant 0 : index
      %c0_24 = arith.constant 0 : index
      %42 = vector.load %arg5[%c0_23, %c0_24] : memref<1x32xf32, #tpu.memory_space<vmem>>, vector<1x32xf32>
      %43 = vector.broadcast %42 : vector<1x32xf32> to vector<8x32xf32>
      %44 = arith.mulf %41, %43 : vector<8x32xf32>
      %c0_25 = arith.constant 0 : index
      %c0_26 = arith.constant 0 : index
      %45 = vector.load %arg6[%c0_25, %c0_26] : memref<1x32xf32, #tpu.memory_space<vmem>>, vector<1x32xf32>
      %46 = vector.broadcast %45 : vector<1x32xf32> to vector<8x32xf32>
      %47 = arith.addf %44, %46 : vector<8x32xf32>
      %c0_27 = arith.constant 0 : index
      %c0_28 = arith.constant 0 : index
      %48 = vector.load %arg10[%c0_27, %c0_28] : memref<8x32xf32, #tpu.memory_space<vmem>>, vector<8x32xf32>
      tpu.vector_store %arg10[%c0_27, %c0_28], %47 {strides = array<i32>} : memref<8x32xf32, #tpu.memory_space<vmem>>, vector<8x32xf32>,
    } else {
    }
    %c0 = arith.constant 0 : index
    %c0_1 = arith.constant 0 : index
    %3 = vector.load %arg10[%c0, %c0_1] : memref<8x32xf32, #tpu.memory_space<vmem>>, vector<8x32xf32>
    %c0_2 = arith.constant 0 : index
    %c0_3 = arith.constant 0 : index
    %4 = vector.load %arg7[%c0_2, %c0_3] : memref<32x256xf32, #tpu.memory_space<vmem>>, vector<32x256xf32>
    %cst = arith.constant dense<0.000000e+00> : vector<8x256xf32>
    %5 = tpu.matmul %3, %4, %cst {dimension_numbers = #tpu.dot_dimension_numbers<[1], [0], [0], [1], [0, 0, 1, 1], [], []>} : vector<8x32xf32>, vector<32x256xf32>, vector<8x256xf32> -> vector<8x256xf32>
    %c0_4 = arith.constant 0 : index
    %c0_5 = arith.constant 0 : index
    %6 = vector.load %arg8[%c0_4, %c0_5] : memref<1x256xf32, #tpu.memory_space<vmem>>, vector<1x256xf32>
    %7 = vector.broadcast %6 : vector<1x256xf32> to vector<8x256xf32>
    %8 = arith.addf %5, %7 : vector<8x256xf32>
    %c0_6 = arith.constant 0 : index
    %c0_7 = arith.constant 0 : index
    %9 = vector.load %arg9[%c0_6, %c0_7] : memref<8x256xf32, #tpu.memory_space<vmem>>, vector<8x256xf32>
    tpu.vector_store %arg9[%c0_6, %c0_7], %8 {strides = array<i32>} : memref<8x256xf32, #tpu.memory_space<vmem>>, vector<8x256xf32>,
    return
  }
  func.func @transform_0(%arg0: i32, %arg1: i32) -> (i32, i32) {
    %c0_i32 = arith.constant 0 : i32
    %c0_i32_0 = arith.constant 0 : i32
    return %arg0, %c0_i32 : i32, i32
  }
  func.func @transform_1(%arg0: i32, %arg1: i32) -> (i32, i32) {
    %c0_i32 = arith.constant 0 : i32
    %c0_i32_0 = arith.constant 0 : i32
    %c0_i32_1 = arith.constant 0 : i32
    return %c0_i32, %c0_i32_0 : i32, i32
  }
  func.func @transform_2(%arg0: i32, %arg1: i32) -> (i32, i32) {
    %c0_i32 = arith.constant 0 : i32
    %c0_i32_0 = arith.constant 0 : i32
    %c0_i32_1 = arith.constant 0 : i32
    return %c0_i32, %c0_i32_0 : i32, i32
  }
  func.func @transform_3(%arg0: i32, %arg1: i32) -> (i32, i32) {
    %c0_i32 = arith.constant 0 : i32
    %c0_i32_0 = arith.constant 0 : i32
    %c0_i32_1 = arith.constant 0 : i32
    return %c0_i32, %c0_i32_0 : i32, i32
  }
  func.func @transform_4(%arg0: i32, %arg1: i32) -> (i32, i32) {
    %c0_i32 = arith.constant 0 : i32
    %c0_i32_0 = arith.constant 0 : i32
    %c0_i32_1 = arith.constant 0 : i32
    return %c0_i32, %c0_i32_0 : i32, i32
  }
  func.func @transform_5(%arg0: i32, %arg1: i32) -> (i32, i32) {
    %c0_i32 = arith.constant 0 : i32
    %c0_i32_0 = arith.constant 0 : i32
    return %c0_i32, %arg1 : i32, i32
  }
  func.func @transform_6(%arg0: i32, %arg1: i32) -> (i32, i32) {
    %c0_i32 = arith.constant 0 : i32
    %c0_i32_0 = arith.constant 0 : i32
    return %c0_i32, %arg1 : i32, i32
  }
  func.func @transform_7(%arg0: i32, %arg1: i32) -> (i32, i32) {
    %c0_i32 = arith.constant 0 : i32
    return %arg0, %arg1 : i32, i32
  }
}

</mosaic_0001>

<llo_original>
// kernel: mlm_head.1
$region0: #{mlm_head.1}
  #allocation0 [shape = 'u32[]', space=smem, size = 0x4, offset = 0x4, fixed_abs, tag = 'smem constant byte address 0x4 - core index']
  #allocation1 [shape = 'u32[144,128]{1,0:T(1,128)}', space=vmem, size = 0x12000, scoped, tag = 'internal scratch']
  #allocation2 [shape = 'f32[8,32]{1,0:T(8,128)}', space=vmem, size = 0x1000, scoped, tag = 'scratch operand']
  %s0 = inlined_call_operand.vmem [shape: f32[16,32], index: 0, kind: input, shape index: {}]
  %s1 = inlined_call_operand.hbm [shape: f32[32,32], index: 1, kind: input, shape index: {}]
  %s2 = inlined_call_operand.vmem [shape: f32[1,32], index: 2, kind: input, shape index: {}]
  %s3 = inlined_call_operand.vmem [shape: f32[1,32], index: 3, kind: input, shape index: {}]
  %s4 = inlined_call_operand.vmem [shape: f32[1,32], index: 4, kind: input, shape index: {}]
  %s5 = inlined_call_operand.hbm [shape: f32[32,256], index: 5, kind: input, shape index: {}]
  %s6 = inlined_call_operand.vmem [shape: f32[1,256], index: 6, kind: input, shape index: {}]
  %s7 = inlined_call_operand.hbm [shape: f32[16,256], index: 7, kind: output, shape index: {}]
  %s8 = sld [smem:[#allocation0]]
  $region73: #{mlm_head.1} parent=0
    _
  %s10 = ssub.s32 1, %s8
  %s11 = scalar_select 0, %s10, %s8
  $region1: #{mlm_head.1} parent=0
    #allocation3 [shape = 'u8[16384]{0}', space=vmem, size = 0x4000, scoped, tag = 'input window, operand 1, single buffered']
    #allocation4 [shape = 's32[2]{0}', space=sflag, size = 0x8, scoped, tag = 'scoped memory for mlm_head.1']
    #allocation5 [shape = 's32[2]{0}', space=sflag, size = 0x8, scoped, tag = 'scoped memory for mlm_head.1']
    #allocation6 [shape = 'u8[32768]{0}', space=vmem, size = 0x8000, scoped, tag = 'input window, operand 5, single buffered']
    #allocation7 [shape = 's32[1]{0}', space=sflag, size = 0x4, scoped, tag = 'scoped memory for mlm_head.1']
    #allocation8 [shape = 'u8[16384]{0}', space=vmem, size = 0x4000, scoped, tag = 'output window, operand 0']
    %12 = vsyncpa [#allocation4], 0
    %13 = vsyncpa [#allocation7], 0
    %14 = vsyncpa [#allocation5], 0
    %s15 = scalar_lea.sflag [#allocation5], 1
    %16 = vsyncpa %s15, 0
    loop: start=0, step=1, limit=4
    $region2: #{mlm_head.1} parent=1 // loop_pre_header
      _
    $region3: #{mlm_head.1} parent=1 // loop_header
      %s18 = sphi 0, %s22
      %p19 = scmp.ge.s32.totalorder %s18, 4
      %s25 = sphi 0, %s37
      %s26 = sphi 0, %s33
      %s27 = sphi 0, %s25
      %s28 = sphi 0, %s26
      %s29 = sphi 0, %s27
      %s30 = sphi 0, %s28
      %s40 = sphi 0, %s42
      %s43 = sphi 0, %s40
      %s44 = sphi 0, %s43
      %s60 = sphi 0, %s44
      %s64 = sphi 0, %s64
      %s66 = sphi 0, %s64
      %s67 = sphi 0, %s66
      %s81 = sphi 0, %s67
      %s85 = sphi 0, %s85
      %s87 = sphi 0, %s85
      %s88 = sphi 0, %s87
      %s102 = sphi 0, %s88
      %s106 = sphi 0, %s106
      %s108 = sphi 0, %s106
      %s109 = sphi 0, %s108
      %s123 = sphi 0, %s109
      %s127 = sphi 0, %s127
      %s129 = sphi 0, %s127
      %s130 = sphi 0, %s129
      %s144 = sphi 0, %s130
      %s150 = sphi 0, %s152
      %s153 = sphi 0, %s150
      %s154 = sphi 0, %s153
      %s170 = sphi 0, %s154
      %s176 = sphi 0, %s178
      %s179 = sphi 0, %s176
      %s180 = sphi 0, %s179
      %s196 = sphi 0, %s180
      %s204 = sphi 0, %s206
      %s207 = sphi 0, %s204
      %s208 = sphi 0, %s207
      %s224 = sphi 0, %s208
    $region4: #{mlm_head.1} parent=1 // loop_header_branch
      %21 = sbr.rel (%p19) target = $region8
    $region5: #{mlm_head.1} parent=1 // loop_body
      %s23 = ssub.s32 %s18, 1
      %s24 = ssub.s32 %s18, 2
      %s31 = sadd.s32 1, %s26
      %p32 = scmp.ge.s32.totalorder %s31, 1
      %s33 = scalar_select %p32, 0, %s31
      %s34 = sadd.s32 1, %s25
      %s35 = scalar_select %p32, %s34, %s25
      %p36 = scmp.ge.s32.totalorder %s35, 2
      %s37 = scalar_select %p36, 0, %s35
      %s38 = ssub.s32 %s25, %s37
      %p39 = scmp.eq.s32.totalorder %s38, 0
      %s41 = sadd.s32 %s40, 1
      %s42 = scalar_select %p39, %s40, %s41
      %p45 = pneg %p39
      %p46 = scmp.eq.s32.totalorder %s18, 1
      %p47 = por %p45, %p46
      %p48 = scmp.ne.s32.totalorder %s40, %s43
      %p49 = scmp.eq.s32.totalorder %s18, 0
      %p50 = por %p48, %p49
      %p51 = scmp.ne.s32.totalorder %s40, %s43
      %p52 = scmp.eq.s32.totalorder %s23, 1
      %p53 = por %p51, %p52
      %p54 = scmp.ne.s32.totalorder %s43, %s44
      %p55 = scmp.eq.s32.totalorder %s23, 0
      %p56 = por %p54, %p55
      %p57 = scmp.ne.s32.totalorder %s43, %s44
      %p58 = scmp.eq.s32.totalorder %s24, 1
      %p59 = por %p57, %p58
      %p61 = scmp.ne.s32.totalorder %s44, %s60
      %p62 = scmp.eq.s32.totalorder %s24, 0
      %p63 = por %p61, %p62
      %s65 = sadd.s32 %s64, 1
      %p68 = scmp.eq.s32.totalorder %s18, 1
      %p69 = scmp.ne.s32.totalorder %s64, %s66
      %p70 = scmp.eq.s32.totalorder %s18, 0
      %p71 = por %p69, %p70
      %p72 = scmp.ne.s32.totalorder %s64, %s66
      %p73 = scmp.eq.s32.totalorder %s23, 1
      %p74 = por %p72, %p73
      %p75 = scmp.ne.s32.totalorder %s66, %s67
      %p76 = scmp.eq.s32.totalorder %s23, 0
      %p77 = por %p75, %p76
      %p78 = scmp.ne.s32.totalorder %s66, %s67
      %p79 = scmp.eq.s32.totalorder %s24, 1
      %p80 = por %p78, %p79
      %p82 = scmp.ne.s32.totalorder %s67, %s81
      %p83 = scmp.eq.s32.totalorder %s24, 0
      %p84 = por %p82, %p83
      %s86 = sadd.s32 %s85, 1
      %p89 = scmp.eq.s32.totalorder %s18, 1
      %p90 = scmp.ne.s32.totalorder %s85, %s87
      %p91 = scmp.eq.s32.totalorder %s18, 0
      %p92 = por %p90, %p91
      %p93 = scmp.ne.s32.totalorder %s85, %s87
      %p94 = scmp.eq.s32.totalorder %s23, 1
      %p95 = por %p93, %p94
      %p96 = scmp.ne.s32.totalorder %s87, %s88
      %p97 = scmp.eq.s32.totalorder %s23, 0
      %p98 = por %p96, %p97
      %p99 = scmp.ne.s32.totalorder %s87, %s88
      %p100 = scmp.eq.s32.totalorder %s24, 1
      %p101 = por %p99, %p100
      %p103 = scmp.ne.s32.totalorder %s88, %s102
      %p104 = scmp.eq.s32.totalorder %s24, 0
      %p105 = por %p103, %p104
      %s107 = sadd.s32 %s106, 1
      %p110 = scmp.eq.s32.totalorder %s18, 1
      %p111 = scmp.ne.s32.totalorder %s106, %s108
      %p112 = scmp.eq.s32.totalorder %s18, 0
      %p113 = por %p111, %p112
      %p114 = scmp.ne.s32.totalorder %s106, %s108
      %p115 = scmp.eq.s32.totalorder %s23, 1
      %p116 = por %p114, %p115
      %p117 = scmp.ne.s32.totalorder %s108, %s109
      %p118 = scmp.eq.s32.totalorder %s23, 0
      %p119 = por %p117, %p118
      %p120 = scmp.ne.s32.totalorder %s108, %s109
      %p121 = scmp.eq.s32.totalorder %s24, 1
      %p122 = por %p120, %p121
      %p124 = scmp.ne.s32.totalorder %s109, %s123
      %p125 = scmp.eq.s32.totalorder %s24, 0
      %p126 = por %p124, %p125
      %s128 = sadd.s32 %s127, 1
      %p131 = scmp.eq.s32.totalorder %s18, 1
      %p132 = scmp.ne.s32.totalorder %s127, %s129
      %p133 = scmp.eq.s32.totalorder %s18, 0
      %p134 = por %p132, %p133
      %p135 = scmp.ne.s32.totalorder %s127, %s129
      %p136 = scmp.eq.s32.totalorder %s23, 1
      %p137 = por %p135, %p136
      %p138 = scmp.ne.s32.totalorder %s129, %s130
      %p139 = scmp.eq.s32.totalorder %s23, 0
      %p140 = por %p138, %p139
      %p141 = scmp.ne.s32.totalorder %s129, %s130
      %p142 = scmp.eq.s32.totalorder %s24, 1
      %p143 = por %p141, %p142
      %p145 = scmp.ne.s32.totalorder %s130, %s144
      %p146 = scmp.eq.s32.totalorder %s24, 0
      %p147 = por %p145, %p146
      %s148 = ssub.s32 %s26, %s33
      %p149 = scmp.eq.s32.totalorder %s148, 0
      %s151 = sadd.s32 %s150, 1
      %s152 = scalar_select %p149, %s150, %s151
      %p155 = pneg %p149
      %p156 = scmp.eq.s32.totalorder %s18, 1
      %p157 = por %p155, %p156
      %p158 = scmp.ne.s32.totalorder %s150, %s153
      %p159 = scmp.eq.s32.totalorder %s18, 0
      %p160 = por %p158, %p159
      %p161 = scmp.ne.s32.totalorder %s150, %s153
      %p162 = scmp.eq.s32.totalorder %s23, 1
      %p163 = por %p161, %p162
      %p164 = scmp.ne.s32.totalorder %s153, %s154
      %p165 = scmp.eq.s32.totalorder %s23, 0
      %p166 = por %p164, %p165
      %p167 = scmp.ne.s32.totalorder %s153, %s154
      %p168 = scmp.eq.s32.totalorder %s24, 1
      %p169 = por %p167, %p168
      %p171 = scmp.ne.s32.totalorder %s154, %s170
      %p172 = scmp.eq.s32.totalorder %s24, 0
      %p173 = por %p171, %p172
      %s174 = ssub.s32 %s26, %s33
      %p175 = scmp.eq.s32.totalorder %s174, 0
      %s177 = sadd.s32 %s176, 1
      %s178 = scalar_select %p175, %s176, %s177
      %p181 = pneg %p175
      %p182 = scmp.eq.s32.totalorder %s18, 1
      %p183 = por %p181, %p182
      %p184 = scmp.ne.s32.totalorder %s176, %s179
      %p185 = scmp.eq.s32.totalorder %s18, 0
      %p186 = por %p184, %p185
      %p187 = scmp.ne.s32.totalorder %s176, %s179
      %p188 = scmp.eq.s32.totalorder %s23, 1
      %p189 = por %p187, %p188
      %p190 = scmp.ne.s32.totalorder %s179, %s180
      %p191 = scmp.eq.s32.totalorder %s23, 0
      %p192 = por %p190, %p191
      %p193 = scmp.ne.s32.totalorder %s179, %s180
      %p194 = scmp.eq.s32.totalorder %s24, 1
      %p195 = por %p193, %p194
      %p197 = scmp.ne.s32.totalorder %s180, %s196
      %p198 = scmp.eq.s32.totalorder %s24, 0
      %p199 = por %p197, %p198
      %s200 = ssub.s32 %s25, %s37
      %s201 = ssub.s32 %s26, %s33
      %s202 = sor.u32 %s200, %s201
      %p203 = scmp.eq.s32.totalorder %s202, 0
      %s205 = sadd.s32 %s204, 1
      %s206 = scalar_select %p203, %s204, %s205
      %p209 = pneg %p203
      %p210 = scmp.eq.s32.totalorder %s18, 1
      %p211 = por %p209, %p210
      %p212 = scmp.ne.s32.totalorder %s204, %s207
      %p213 = scmp.eq.s32.totalorder %s18, 0
      %p214 = por %p212, %p213
      %p215 = scmp.ne.s32.totalorder %s204, %s207
      %p216 = scmp.eq.s32.totalorder %s23, 1
      %p217 = por %p215, %p216
      %p218 = scmp.ne.s32.totalorder %s207, %s208
      %p219 = scmp.eq.s32.totalorder %s23, 0
      %p220 = por %p218, %p219
      %p221 = scmp.ne.s32.totalorder %s207, %s208
      %p222 = scmp.eq.s32.totalorder %s24, 1
      %p223 = por %p221, %p222
      %p225 = scmp.ne.s32.totalorder %s208, %s224
      %p226 = scmp.eq.s32.totalorder %s24, 0
      %p227 = por %p225, %p226
      %p228 = scmp.le.s32.totalorder 1, %s18
      %p229 = scmp.lt.s32.totalorder %s18, 3
      %p230 = pnand %p228, %p229
      %p231 = pneg %p230
      // Predicated region
      $region9: #{mlm_head.1} parent=5 // pred_check
        _
      $region10: #{mlm_head.1} parent=5 // pred_check_branch
        %233 = sbr.rel (%p230) target = $region12
      $region11: #{mlm_head.1} parent=5 // pred_region
        %s234 = ssub.s32 %s18, 1
        // Predicated region
        $region13: #{mlm_head.1} parent=11 // pred_check
          %p235 = pneg %p77
        $region14: #{mlm_head.1} parent=11 // pred_check_branch
          %237 = sbr.rel (%p235) target = $region16
        $region15: #{mlm_head.1} parent=11 // pred_region
          %s239 = ssub.s32 512, 512
          %240 = vsyncadd [#allocation4], %s239
          %s241 = sshll.u32 [#allocation3], 4
          %s242 = int_to_ptr.vmem [resolvable:$true] %s241
          %247 = dma.hbm_to_vmem [thread:$0]  %s1, 512, %s242, [#allocation4], 128, 128, 8
        $region16: #{mlm_head.1} parent=11 // pred_fallthru
          _
        // Predicated region
        $region17: #{mlm_head.1} parent=11 // pred_check
          %p248 = pneg %p98
        $region18: #{mlm_head.1} parent=11 // pred_check_branch
          %250 = sbr.rel (%p248) target = $region20
        $region19: #{mlm_head.1} parent=11 // pred_region
          _
        $region20: #{mlm_head.1} parent=11 // pred_fallthru
          _
        // Predicated region
        $region21: #{mlm_head.1} parent=11 // pred_check
          %p251 = pneg %p119
        $region22: #{mlm_head.1} parent=11 // pred_check_branch
          %253 = sbr.rel (%p251) target = $region24
        $region23: #{mlm_head.1} parent=11 // pred_region
          _
        $region24: #{mlm_head.1} parent=11 // pred_fallthru
          _
        // Predicated region
        $region25: #{mlm_head.1} parent=11 // pred_check
          %p254 = pneg %p140
        $region26: #{mlm_head.1} parent=11 // pred_check_branch
          %256 = sbr.rel (%p254) target = $region28
        $region27: #{mlm_head.1} parent=11 // pred_region
          _
        $region28: #{mlm_head.1} parent=11 // pred_fallthru
          _
        // Predicated region
        $region29: #{mlm_head.1} parent=11 // pred_check
          %p257 = pneg %p166
        $region30: #{mlm_head.1} parent=11 // pred_check_branch
          %259 = sbr.rel (%p257) target = $region32
        $region31: #{mlm_head.1} parent=11 // pred_region
          %s260 = smul.u32 2, %s28
          %s262 = ssub.s32 1024, 1024
          %263 = vsyncadd [#allocation7], %s262
          %s264 = smul.addr %s260, 128
          %s265 = scalar_lea.hbm %s5, %s264
          %s266 = sshll.u32 [#allocation6], 4
          %s267 = int_to_ptr.vmem [resolvable:$true] %s266
          %272 = dma.hbm_to_vmem [thread:$0]  %s265, 1024, %s267, [#allocation7], 256, 256, 16
        $region32: #{mlm_head.1} parent=11 // pred_fallthru
          _
        // Predicated region
        $region33: #{mlm_head.1} parent=11 // pred_check
          %p273 = pneg %p192
        $region34: #{mlm_head.1} parent=11 // pred_check_branch
          %275 = sbr.rel (%p273) target = $region36
        $region35: #{mlm_head.1} parent=11 // pred_region
          %s276 = smul.u32 2, %s28
          %p277 = scmp.lt.s32.totalorder %s276, 1
          %s278 = scalar_select %p277, %s276, 1
          %s279 = scalar_lea.vmem %s6, %s278
          %s280 = smul.u32 2, %s28
        $region36: #{mlm_head.1} parent=11 // pred_fallthru
          _
      $region12: #{mlm_head.1} parent=5 // pred_fallthru
        _
      %p281 = scmp.lt.s32.totalorder %s18, 2
      // Predicated region
      $region37: #{mlm_head.1} parent=5 // pred_check
        %p282 = pneg %p281
      $region38: #{mlm_head.1} parent=5 // pred_check_branch
        %284 = sbr.rel (%p282) target = $region40
      $region39: #{mlm_head.1} parent=5 // pred_region
        // Predicated region
        $region41: #{mlm_head.1} parent=39 // pred_check
          %p285 = pneg %p50
        $region42: #{mlm_head.1} parent=39 // pred_check_branch
          %287 = sbr.rel (%p285) target = $region44
        $region43: #{mlm_head.1} parent=39 // pred_region
          %p288 = scmp.lt.s32.totalorder %s25, 1
          %s289 = scalar_select %p288, %s25, 1
          %s290 = smul.addr %s289, 8
          %s291 = scalar_lea.vmem %s0, %s290
        $region44: #{mlm_head.1} parent=39 // pred_fallthru
          _
      $region40: #{mlm_head.1} parent=5 // pred_fallthru
        _
      %p292 = scmp.le.s32.totalorder 1, %s18
      %p293 = scmp.lt.s32.totalorder %s18, 3
      %p294 = pnand %p292, %p293
      %p295 = pneg %p294
      // Predicated region
      $region45: #{mlm_head.1} parent=5 // pred_check
        _
      $region46: #{mlm_head.1} parent=5 // pred_check_branch
        %297 = sbr.rel (%p294) target = $region48
      $region47: #{mlm_head.1} parent=5 // pred_region
        %s298 = ssub.s32 %s18, 1
        // Predicated region
        $region49: #{mlm_head.1} parent=47 // pred_check
          %p299 = pneg %p77
        $region50: #{mlm_head.1} parent=47 // pred_check_branch
          %301 = sbr.rel (%p299) target = $region52
        $region51: #{mlm_head.1} parent=47 // pred_region
          %302 = dma.done [#allocation4], 512
        $region52: #{mlm_head.1} parent=47 // pred_fallthru
          _
        // Predicated region
        $region53: #{mlm_head.1} parent=47 // pred_check
          %p303 = pneg %p166
        $region54: #{mlm_head.1} parent=47 // pred_check_branch
          %305 = sbr.rel (%p303) target = $region56
        $region55: #{mlm_head.1} parent=47 // pred_region
          %306 = dma.done [#allocation7], 1024
        $region56: #{mlm_head.1} parent=47 // pred_fallthru
          _
        %p307 = scmp.lt.s32.totalorder %s27, 1
        %s308 = scalar_select %p307, %s27, 1
        %s309 = smul.addr %s308, 8
        %s310 = scalar_lea.vmem %s0, %s309
        %p311 = pneg %p56
        %p312 = pneg %p53
        %p313 = pneg %p77
        %p314 = pneg %p74
        %p315 = pneg %p98
        %p316 = pneg %p95
        %p317 = pneg %p119
        %p318 = pneg %p116
        %p319 = pneg %p140
        %p320 = pneg %p137
        %p321 = pneg %p166
        %p322 = pneg %p163
        %s323 = smul.u32 2, %s28
        %p324 = scmp.lt.s32.totalorder %s323, 1
        %s325 = scalar_select %p324, %s323, 1
        %s326 = scalar_lea.vmem %s6, %s325
        %p327 = pneg %p192
        %p328 = pneg %p189
        %p329 = pneg %p220
        %p330 = pneg %p217
        %s331 = sand.u32 %s207, 1
        %s332 = scalar_lea.sflag [#allocation5], %s331
        %s333 = sand.u32 %s207, 1
        %s334 = smul.addr %s333, 16
        %s335 = scalar_lea.vmem [#allocation8], %s334
        %p336 = scmp.lt.s32.totalorder %s27, 1
        %s337 = scalar_select %p336, %s27, 1
        %s338 = smul.addr %s337, 8
        %s339 = scalar_lea.vmem %s0, %s338
        %s340 = smul.u32 2, %s28
        %s341 = smul.u32 2, %s28
        %p342 = scmp.lt.s32.totalorder %s341, 1
        %s343 = scalar_select %p342, %s341, 1
        %s344 = scalar_lea.vmem %s6, %s343
        %s345 = smul.u32 2, %s28
        %s346 = smul.u32 2, %s28
        %p347 = scmp.eq.s32.totalorder %s28, 0
        // Predicated region
        $region57: #{mlm_head.1} parent=47 // pred_check
          %p348 = pneg %p347
        $region58: #{mlm_head.1} parent=47 // pred_check_branch
          %350 = sbr.rel (%p348) target = $region60
        $region59: #{mlm_head.1} parent=47 // pred_region
          %v351 = vld [vmem:[%s339] sm:$0xff]
          %v352 = vld [vmem:[#allocation3] sm:$0xff]
          %v353 = vld [vmem:[#allocation3 + $0x8] sm:$0xff]
          %v354 = vld [vmem:[#allocation3 + $0x10] sm:$0xff]
          %v355 = vld [vmem:[#allocation3 + $0x18] sm:$0xff]
          %v356 = vld [vmem:[%s2] sm:$0x1]
          %v358 = vlaneseq
          %v359 = vshrl.u32 %v358, 7
          %v360 = vsub.s32 0, %v359
          %v361 = vrot.slane %v356, %v360
          %vm363 = vcmask 261120
          %v365 = vsel %vm363, %v351, 0
          %367 = vmatprep.subr.mxu0 0.0
          %368 = vmatpush1.msra.mxu0 %v352
          %369 = vmatprep.subr.mxu0 0.0
          %370 = vmatpush1.msra.mxu0 %v353
          %371 = vmatprep.subr.mxu0 0.0
          %372 = vmatpush1.msra.mxu0 %v354
          %373 = vmatprep.subr.mxu0 0.0
          %374 = vmatpush1.msra.mxu0 %v355
          %375 = vmatprep.subr.mxu0 0.0
          %376 = vmatpush1.msra.mxu0 0.0
          %377 = vmatprep.subr.mxu0 0.0
          %378 = vmatpush1.msra.mxu0 0.0
          %379 = vmatprep.subr.mxu0 0.0
          %380 = vmatpush1.msra.mxu0 0.0
          %381 = vmatprep.subr.mxu0 0.0
          %382 = vmatpush1.msra.mxu0 0.0
          %383 = vmatprep.subr.mxu0 0.0
          %384 = vmatpush1.msra.mxu0 0.0
          %385 = vmatprep.subr.mxu0 0.0
          %386 = vmatpush1.msra.mxu0 0.0
          %387 = vmatprep.subr.mxu0 0.0
          %388 = vmatpush1.msra.mxu0 0.0
          %389 = vmatprep.subr.mxu0 0.0
          %390 = vmatpush1.msra.mxu0 0.0
          %391 = vmatprep.subr.mxu0 0.0
          %392 = vmatpush1.msra.mxu0 0.0
          %393 = vmatprep.subr.mxu0 0.0
          %394 = vmatpush1.msra.mxu0 0.0
          %395 = vmatprep.subr.mxu0 0.0
          %396 = vmatpush1.msra.mxu0 0.0
          %397 = vmatprep.subr.mxu0 0.0
          %398 = vmatpush1.msra.mxu0 0.0
          %399 = vmatprep.subr.mxu0 0.0
          %400 = vmatpush1.msra.mxu0 0.0
          %401 = vmatprep.subr.mxu0 0.0
          %402 = vmatpush1.msra.mxu0 0.0
          %403 = vmatprep.subr.mxu0 0.0
          %404 = vmatpush1.msra.mxu0 0.0
          %405 = vmatprep.subr.mxu0 0.0
          %406 = vmatpush1.msra.mxu0 0.0
          %407 = vmatprep.subr.mxu0 0.0
          %408 = vmatpush1.msra.mxu0 0.0
          %409 = vmatprep.subr.mxu0 0.0
          %410 = vmatpush1.msra.mxu0 0.0
          %411 = vmatprep.subr.mxu0 0.0
          %412 = vmatpush1.msra.mxu0 0.0
          %413 = vmatprep.subr.mxu0 0.0
          %414 = vmatpush1.msra.mxu0 0.0
          %415 = vmatprep.subr.mxu0 0.0
          %416 = vmatpush1.msra.mxu0 0.0
          %417 = vmatprep.subr.mxu0 0.0
          %418 = vmatpush1.msra.mxu0 0.0
          %419 = vmatprep.subr.mxu0 0.0
          %420 = vmatpush1.msra.mxu0 0.0
          %421 = vmatprep.subr.mxu0 0.0
          %422 = vmatpush1.msra.mxu0 0.0
          %423 = vmatprep.subr.mxu0 0.0
          %424 = vmatpush1.msra.mxu0 0.0
          %425 = vmatprep.subr.mxu0 0.0
          %426 = vmatpush1.msra.mxu0 0.0
          %427 = vmatprep.subr.mxu0 0.0
          %428 = vmatpush1.msra.mxu0 0.0
          %429 = vmatprep.subr.mxu0 0.0
          %430 = vmatpush1.msra.mxu0 0.0
          %431 = vmatprep.mubr.f32.mxu0 0.0
          %432 = vmatmul.mubr.f32.gmra.mrb[0].mxu0 %v365
          %v433 = vpop.f32.mrb[0].mxu0
          %v434 = vadd.f32 %v361, %v433
          %v435 = vpop.f32.mrb[0].mxu0
          %436 = vdwg.mxu0
          %v437 = vmul.f32 %v434, 0.5
          %v438 = vmul.f32 %v434, 0.70710677
          %v439 = verf.f32.pop %v438
          %v440 = vadd.f32 %v439, 1.0
          %v441 = vmul.f32 %v437, %v440
          %v442 = vsel %vm363, %v441, 0.0
          %443 = vadd.xlane.f32.xlu0 %v442
          %v444 = vpop.xlane.xlu0 %443
          %v445 = vrcp.pop 32.0
          %v446 = vmul.f32 %v444, %v445
          %v447 = vsub.f32 %v441, %v446
          %v448 = vmul.f32 %v447, %v447
          %v449 = vsel %vm363, %v448, 0.0
          %450 = vadd.xlane.f32.xlu0 %v449
          %v451 = vpop.xlane.xlu0 %450
          %v452 = vmul.f32 %v451, %v445
          %v453 = vadd.f32 %v452, 1e-12
          %v454 = vrsqrt.pop %v453
          %v455 = vmul.f32 %v447, %v454
          %v456 = vld [vmem:[%s3] sm:$0x1]
          %v458 = vlaneseq
          %v459 = vshrl.u32 %v458, 7
          %v460 = vsub.s32 0, %v459
          %v461 = vrot.slane %v456, %v460
          %v463 = vmul.f32 %v455, %v461
          %v464 = vld [vmem:[%s4] sm:$0x1]
          %v466 = vlaneseq
          %v467 = vshrl.u32 %v466, 7
          %v468 = vsub.s32 0, %v467
          %v469 = vrot.slane %v464, %v468
          %v471 = vadd.f32 %v463, %v469
          %472 = vst.msk [vmem:[#allocation2] sm:$0xff] %vm363, %v471
        $region60: #{mlm_head.1} parent=47 // pred_fallthru
          _
        %v473 = vld [vmem:[#allocation2] sm:$0xff]
        %v474 = vld [vmem:[#allocation6] sm:$0xff]
        %v475 = vld [vmem:[#allocation6 + $0x8] sm:$0xff]
        %v476 = vld [vmem:[#allocation6 + $0x10] sm:$0xff]
        %v477 = vld [vmem:[#allocation6 + $0x18] sm:$0xff]
        %v478 = vld [vmem:[#allocation6 + $0x20] sm:$0xff]
        %v479 = vld [vmem:[#allocation6 + $0x28] sm:$0xff]
        %v480 = vld [vmem:[#allocation6 + $0x30] sm:$0xff]
        %v481 = vld [vmem:[#allocation6 + $0x38] sm:$0xff]
        %v482 = vld [vmem:[%s344] sm:$0x3]
        %v484 = vlaneseq
        %v485 = vshrl.u32 %v484, 7
        %v486 = vsub.s32 0, %v485
        %v487 = vrot.slane %v482, %v486
        %v488 = vlaneseq
        %v489 = vshrl.u32 %v488, 7
        %v490 = vsub.s32 1, %v489
        %v491 = vrot.slane %v482, %v490
        %vm494 = vcmask 261120
        %v496 = vsel %vm494, %v473, 0
        %498 = vmatprep.subr.mxu0 %v475
        %499 = vmatpush1.msra.mxu0 %v474
        %500 = vmatprep.subr.mxu0 %v477
        %501 = vmatpush1.msra.mxu0 %v476
        %502 = vmatprep.subr.mxu0 %v479
        %503 = vmatpush1.msra.mxu0 %v478
        %504 = vmatprep.subr.mxu0 %v481
        %505 = vmatpush1.msra.mxu0 %v480
        %506 = vmatprep.subr.mxu0 0.0
        %507 = vmatpush1.msra.mxu0 0.0
        %508 = vmatprep.subr.mxu0 0.0
        %509 = vmatpush1.msra.mxu0 0.0
        %510 = vmatprep.subr.mxu0 0.0
        %511 = vmatpush1.msra.mxu0 0.0
        %512 = vmatprep.subr.mxu0 0.0
        %513 = vmatpush1.msra.mxu0 0.0
        %514 = vmatprep.subr.mxu0 0.0
        %515 = vmatpush1.msra.mxu0 0.0
        %516 = vmatprep.subr.mxu0 0.0
        %517 = vmatpush1.msra.mxu0 0.0
        %518 = vmatprep.subr.mxu0 0.0
        %519 = vmatpush1.msra.mxu0 0.0
        %520 = vmatprep.subr.mxu0 0.0
        %521 = vmatpush1.msra.mxu0 0.0
        %522 = vmatprep.subr.mxu0 0.0
        %523 = vmatpush1.msra.mxu0 0.0
        %524 = vmatprep.subr.mxu0 0.0
        %525 = vmatpush1.msra.mxu0 0.0
        %526 = vmatprep.subr.mxu0 0.0
        %527 = vmatpush1.msra.mxu0 0.0
        %528 = vmatprep.subr.mxu0 0.0
        %529 = vmatpush1.msra.mxu0 0.0
        %530 = vmatprep.subr.mxu0 0.0
        %531 = vmatpush1.msra.mxu0 0.0
        %532 = vmatprep.subr.mxu0 0.0
        %533 = vmatpush1.msra.mxu0 0.0
        %534 = vmatprep.subr.mxu0 0.0
        %535 = vmatpush1.msra.mxu0 0.0
        %536 = vmatprep.subr.mxu0 0.0
        %537 = vmatpush1.msra.mxu0 0.0
        %538 = vmatprep.subr.mxu0 0.0
        %539 = vmatpush1.msra.mxu0 0.0
        %540 = vmatprep.subr.mxu0 0.0
        %541 = vmatpush1.msra.mxu0 0.0
        %542 = vmatprep.subr.mxu0 0.0
        %543 = vmatpush1.msra.mxu0 0.0
        %544 = vmatprep.subr.mxu0 0.0
        %545 = vmatpush1.msra.mxu0 0.0
        %546 = vmatprep.subr.mxu0 0.0
        %547 = vmatpush1.msra.mxu0 0.0
        %548 = vmatprep.subr.mxu0 0.0
        %549 = vmatpush1.msra.mxu0 0.0
        %550 = vmatprep.subr.mxu0 0.0
        %551 = vmatpush1.msra.mxu0 0.0
        %552 = vmatprep.subr.mxu0 0.0
        %553 = vmatpush1.msra.mxu0 0.0
        %554 = vmatprep.subr.mxu0 0.0
        %555 = vmatpush1.msra.mxu0 0.0
        %556 = vmatprep.subr.mxu0 0.0
        %557 = vmatpush1.msra.mxu0 0.0
        %558 = vmatprep.subr.mxu0 0.0
        %559 = vmatpush1.msra.mxu0 0.0
        %560 = vmatprep.subr.mxu0 0.0
        %561 = vmatpush1.msra.mxu0 0.0
        %562 = vmatprep.mubr.f32.mxu0 0.0
        %563 = vmatmul.mubr.f32.gmra.mrb[0].mxu0 %v496
        %v564 = vpop.f32.mrb[0].mxu0
        %v565 = vadd.f32 %v487, %v564
        %v566 = vpop.f32.mrb[0].mxu0
        %v567 = vadd.f32 %v491, %v566
        %568 = vdwg.mxu0
        %569 = vst [vmem:[%s335] sm:$0xff] %v565
        %570 = vst [vmem:[%s335 + $0x8] sm:$0xff] %v567
        %s571 = sand.u32 %s207, 1
        %s572 = scalar_lea.sflag [#allocation5], %s571
        %s573 = sand.u32 %s207, 1
        %s574 = smul.addr %s573, 16
        %s575 = scalar_lea.vmem [#allocation8], %s574
        // Predicated region
        $region61: #{mlm_head.1} parent=47 // pred_check
          %p576 = pneg %p217
        $region62: #{mlm_head.1} parent=47 // pred_check_branch
          %578 = sbr.rel (%p576) target = $region64
        $region63: #{mlm_head.1} parent=47 // pred_region
          %s579 = smul.u32 2, %s28
          %s581 = ssub.s32 256, 256
          %582 = vsyncadd %s572, %s581
          %s583 = smul.addr %s27, 2
          %s584 = sadd.s32 %s579, %s583
          %s585 = smul.addr %s584, 128
          %s586 = scalar_lea.hbm %s7, %s585
          %s588 = sshll.u32 %s575, 4
          %s589 = int_to_ptr.vmem [resolvable:$true] %s588
          %591 = dma.vmem_to_hbm [thread:$0]  %s589, 256, %s586, %s572
        $region64: #{mlm_head.1} parent=47 // pred_fallthru
          _
      $region48: #{mlm_head.1} parent=5 // pred_fallthru
        _
      %p592 = scmp.le.s32.totalorder 2, %s18
      // Predicated region
      $region65: #{mlm_head.1} parent=5 // pred_check
        %p593 = pneg %p592
      $region66: #{mlm_head.1} parent=5 // pred_check_branch
        %595 = sbr.rel (%p593) target = $region68
      $region67: #{mlm_head.1} parent=5 // pred_region
        %s596 = ssub.s32 %s18, 2
        // Predicated region
        $region69: #{mlm_head.1} parent=67 // pred_check
          %p597 = pneg %p223
        $region70: #{mlm_head.1} parent=67 // pred_check_branch
          %599 = sbr.rel (%p597) target = $region72
        $region71: #{mlm_head.1} parent=67 // pred_region
          %s600 = sand.u32 %s208, 1
          %s601 = scalar_lea.sflag [#allocation5], %s600
          %s602 = sand.u32 %s208, 1
          %s603 = smul.addr %s602, 16
          %s604 = scalar_lea.vmem [#allocation8], %s603
          %605 = dma.done %s601, 256
        $region72: #{mlm_head.1} parent=67 // pred_fallthru
          _
      $region68: #{mlm_head.1} parent=5 // pred_fallthru
        _
    $region6: #{mlm_head.1} parent=1 // loop_footer
      %s22 = sadd.s32 1, %s18
    $region7: #{mlm_head.1} parent=1 // loop_footer_branch
      %17 = sbr.rel target = $region3
    $region8: #{mlm_head.1} parent=1 // loop_exit
      _
    %606 = vsyncpa [#allocation4], 1
    %s607 = scalar_lea.sflag [#allocation4], 1
    %608 = vsyncpa %s607, 1
    %609 = vsyncpa [#allocation7], 1
    %610 = vsyncpa [#allocation5], 1
    %s611 = scalar_lea.sflag [#allocation5], 1
    %612 = vsyncpa %s611, 1

</llo_original>
